<compile_context>
chip_gen: v6e
topology: v6e:2x2x1
jax: 0.10.0
libtpu: 0.0.40
codegen_flags: <defaults>
</compile_context>

<pallas_src>
import jax
import jax.numpy as jnp
from jax.experimental import pallas as pl
from jax.experimental.pallas import tpu as pltpu


# --------------------------------------------------------------------------
# helpers
# --------------------------------------------------------------------------
def _cdiv(a, b):
    return -(-a // b)


def _round_up(x, m):
    return _cdiv(x, m) * m


def _pad2d(a, rows, cols):
    pr, pc = rows - a.shape[0], cols - a.shape[1]
    if pr or pc:
        a = jnp.pad(a, ((0, pr), (0, pc)))
    return a


def _vmem_capacity_bytes():
    try:
        return int(pltpu.get_tpu_info().vmem_capacity_bytes)
    except Exception:
        return 64 * 1024 * 1024          # conservative (v7x per-TC)


# --------------------------------------------------------------------------
# kernel
# --------------------------------------------------------------------------
def _mlp2_kernel(x_ref, wgu_ref, wd_ref, o_ref, acc_ref):
    # x_ref  : [tm, D]      token tile, original dtype (resident across h)
    # wgu_ref: [D, 2*tH]    fused [gate | up] weight chunk (streams over h)
    # wd_ref : [tH, O]      down_proj weight chunk          (streams over h)
    # o_ref  : [tm, O]      output tile (written on last h step)
    # acc_ref: [tm, O]      f32 VMEM accumulator
    h = pl.program_id(1)
    th = wd_ref.shape[0]

    @pl.when(h == 0)
    def _():
        acc_ref[...] = jnp.zeros_like(acc_ref)

    x = x_ref[...].astype(jnp.bfloat16)          # VPU cast, no extra HBM pass
    gu = jnp.dot(x, wgu_ref[...], preferred_element_type=jnp.float32)
    gate = gu[:, :th]
    up = gu[:, th:]

    hidden = (gate * jax.nn.sigmoid(gate)) * up   # SiLU gating in f32

    acc_ref[...] += jnp.dot(hidden.astype(wd_ref.dtype), wd_ref[...],
                            preferred_element_type=jnp.float32)

    @pl.when(h == pl.num_programs(1) - 1)
    def _():
        o_ref[...] = acc_ref[...].astype(o_ref.dtype)


# --------------------------------------------------------------------------
# one-time weight preparation (hoisted out of the per-forward path)
# --------------------------------------------------------------------------
def prepare_mlp2_weights(w_gate, w_up, w_down, *, th=None):
    """Transpose to [in, out], pad to 128-multiples, cast to bf16 and fuse the
    gate/up projections into one chunk-interleaved operand.  Call once."""
    hidden_features, in_features = w_gate.shape
    out_features = w_down.shape[0]

    D_pad = _round_up(in_features, 128)
    H_pad = _round_up(hidden_features, 128)
    O_pad = _round_up(out_features, 128)

    vmem_cap = _vmem_capacity_bytes()
    vmem_limit = min(100 * 1024 * 1024, vmem_cap - 16 * 1024 * 1024)
    budget = int(vmem_limit * 0.9)

    # H-chunk size: keep the double-buffered weight streams within half the
    # budget, then pick the divisor-friendly 128-multiple (minimal dead
    # columns in the last chunk).
    if th is None:
        th = 512
        while th > 128 and 4 * th * (2 * D_pad + O_pad) > budget // 2:
            th //= 2
    th = max(128, _round_up(min(th, H_pad), 128))
    n_h = _cdiv(H_pad, th)
    th_eff = 128 * _cdiv(H_pad // 128, n_h)
    H_tiled = n_h * th_eff

    wg_t = _pad2d(w_gate.T, D_pad, H_tiled).astype(jnp.bfloat16)   # [D, Ht]
    wu_t = _pad2d(w_up.T, D_pad, H_tiled).astype(jnp.bfloat16)     # [D, Ht]
    # Interleave per chunk: [g_0 | u_0 | g_1 | u_1 | ...] so each grid step
    # streams one contiguous lane-dense [D, 2*th] block.
    wgu = jnp.stack(
        [wg_t.reshape(D_pad, n_h, th_eff), wu_t.reshape(D_pad, n_h, th_eff)],
        axis=2,
    ).reshape(D_pad, 2 * H_tiled)
    wd_t = _pad2d(w_down.T, H_tiled, O_pad).astype(jnp.bfloat16)   # [Ht, O]

    return dict(
        wgu=wgu, wd=wd_t,
        in_features=in_features, out_features=out_features,
        D_pad=D_pad, O_pad=O_pad, th=th_eff, n_h=n_h,
        vmem_cap=vmem_cap, vmem_limit=vmem_limit, budget=budget,
    )


# --------------------------------------------------------------------------
# forward
# --------------------------------------------------------------------------
def mlp2_forward(x, params, *, tm=None):
    """x: [..., in_features]; params from prepare_mlp2_weights."""
    in_features = params["in_features"]
    out_features = params["out_features"]
    D_pad, O_pad = params["D_pad"], params["O_pad"]
    th_eff, n_h = params["th"], params["n_h"]

    lead_shape = x.shape[:-1]
    x2d = x.reshape(-1, in_features)
    T = x2d.shape[0]
    out_dtype = x.dtype

    x_bytes = jnp.dtype(x.dtype).itemsize
    o_bytes = jnp.dtype(out_dtype).itemsize

    # Token tile: big on 128 MiB-VMEM parts (cuts weight re-streaming and
    # grid-step overhead), smaller on 64 MiB v7x; ensure >=2 tiles when T
    # allows so both v7x TensorCores get work; shrink to fit the VMEM budget.
    if tm is None:
        tm = 512 if params["vmem_cap"] >= 100 * 1024 * 1024 else 256
    tm_eff = max(16, min(_round_up(tm, 16), _round_up(T, 16)))
    if _cdiv(T, tm_eff) < 2 and T > 16:
        tm_eff = _round_up(_cdiv(T, 2), 16)

    w_blk = 2 * 2 * (D_pad * 2 * th_eff + th_eff * O_pad)   # bf16, 2-buffered

    def _vmem_usage(t):
        return (2 * t * D_pad * x_bytes          # x blocks
                + w_blk                          # fused gate/up + down weights
                + 2 * t * O_pad * o_bytes        # output blocks
                + t * O_pad * 4)                 # f32 accumulator

    while tm_eff > 16 and _vmem_usage(tm_eff) > params["budget"]:
        tm_eff = max(16, _round_up(tm_eff // 2, 16))

    T_pad = _round_up(T, tm_eff)
    x2d_p = _pad2d(x2d, T_pad, D_pad)            # keep original dtype

    grid = (T_pad // tm_eff, n_h)

    out2d = pl.pallas_call(
        _mlp2_kernel,
        out_shape=jax.ShapeDtypeStruct((T_pad, O_pad), out_dtype),
        grid_spec=pltpu.PrefetchScalarGridSpec(
            num_scalar_prefetch=0,
            grid=grid,
            in_specs=[
                pl.BlockSpec((tm_eff, D_pad), lambda i, h: (i, 0)),
                pl.BlockSpec((D_pad, 2 * th_eff), lambda i, h: (0, h)),
                pl.BlockSpec((th_eff, O_pad), lambda i, h: (h, 0)),
            ],
            out_specs=pl.BlockSpec((tm_eff, O_pad), lambda i, h: (i, 0)),
            scratch_shapes=[pltpu.VMEM((tm_eff, O_pad), jnp.float32)],
        ),
        compiler_params=pltpu.CompilerParams(
            dimension_semantics=("parallel", "arbitrary"),
            vmem_limit_bytes=int(params["vmem_limit"]),
        ),
    )(x2d_p, params["wgu"], params["wd"])

    out2d = out2d[:T, :out_features]
    return out2d.reshape(*lead_shape, out_features)


# --------------------------------------------------------------------------
# reference (same bf16-inputs / f32-accumulation recipe)
# --------------------------------------------------------------------------
def _reference_bf16(x, w_gate, w_up, w_down):
    xb = x.astype(jnp.bfloat16)
    g = jnp.dot(xb, w_gate.T.astype(jnp.bfloat16),
                preferred_element_type=jnp.float32)
    u = jnp.dot(xb, w_up.T.astype(jnp.bfloat16),
                preferred_element_type=jnp.float32)
    h = (g * jax.nn.sigmoid(g)) * u
    out = jnp.dot(h.astype(jnp.bfloat16), w_down.T.astype(jnp.bfloat16),
                  preferred_element_type=jnp.float32)
    return out.astype(x.dtype)


if __name__ == "__main__":
    # Small shapes consistent with the module: batch=2, seq=8,
    # in_features=32, hidden_features=64, out_features=32.
    B, S = 2, 8
    in_features, hidden_features, out_features = 32, 64, 32

    key = jax.random.PRNGKey(0)
    kx, kg, ku, kd = jax.random.split(key, 4)

    x = jax.random.normal(kx, (B, S, in_features), dtype=jnp.float32)

    # Deterministic parameter init (nn.Linear default-like uniform scale),
    # stored in PyTorch layout [out_features, in_features].
    def init_linear(k, fan_out, fan_in):
        bound = 1.0 / jnp.sqrt(jnp.float32(fan_in))
        return jax.random.uniform(k, (fan_out, fan_in), jnp.float32,
                                  minval=-bound, maxval=bound)

    w_gate = init_linear(kg, hidden_features, in_features)
    w_up = init_linear(ku, hidden_features, in_features)
    w_down = init_linear(kd, out_features, hidden_features)

    params = prepare_mlp2_weights(w_gate, w_up, w_down)   # one-time prep
    y = mlp2_forward(x, params)
    y = jax.block_until_ready(y)

    y_ref = _reference_bf16(x, w_gate, w_up, w_down)
    assert y.shape == (B, S, out_features)
    assert jnp.allclose(y, y_ref, atol=1e-2, rtol=1e-2), (
        float(jnp.max(jnp.abs(y - y_ref))))

    print("KERNEL_OK")
</pallas_src>

<mosaic_0001>
module attributes {stable_mosaic.version = 11 : i64} {
  func.func @_mlp2_kernel(%arg0: i32, %arg1: i32, %arg2: memref<16x128xf32, #tpu.memory_space<vmem>>, %arg3: memref<128x256xbf16, #tpu.memory_space<vmem>>, %arg4: memref<128x128xbf16, #tpu.memory_space<vmem>>, %arg5: memref<16x128xf32, #tpu.memory_space<vmem>>, %arg6: memref<16x128xf32, #tpu.memory_space<vmem>>) attributes {dimension_semantics = [#tpu.dimension_semantics<parallel>, #tpu.dimension_semantics<arbitrary>], iteration_bounds = array<i64: 1, 1>, scalar_prefetch = 0 : i64, scratch_operands = 1 : i64, tpu.core_type = #tpu.core_type<tc>, window_params = [{transform_indices = @transform_0, window_bounds = array<i64: 16, 128>}, {transform_indices = @transform_1, window_bounds = array<i64: 128, 256>}, {transform_indices = @transform_2, window_bounds = array<i64: 128, 128>}, {transform_indices = @transform_3, window_bounds = array<i64: 16, 128>}]} {
    %c0_i32 = arith.constant 0 : i32
    %0 = arith.cmpi eq, %arg1, %c0_i32 : i32
    %1 = arith.extui %0 : i1 to i32
    %c0_i32_0 = arith.constant 0 : i32
    %2 = arith.cmpi ne, %1, %c0_i32_0 : i32
    scf.if %2 {
      %cst_14 = arith.constant 0.000000e+00 : f32
      %25 = vector.broadcast %cst_14 : f32 to vector<16x128xf32>
      %c0_15 = arith.constant 0 : index
      %c0_16 = arith.constant 0 : index
      %26 = vector.load %arg6[%c0_15, %c0_16] : memref<16x128xf32, #tpu.memory_space<vmem>>, vector<16x128xf32>
      tpu.vector_store %arg6[%c0_15, %c0_16], %25 {strides = array<i32>} : memref<16x128xf32, #tpu.memory_space<vmem>>, vector<16x128xf32>,
    } else {
    }
    %c0 = arith.constant 0 : index
    %c0_1 = arith.constant 0 : index
    %3 = vector.load %arg2[%c0, %c0_1] : memref<16x128xf32, #tpu.memory_space<vmem>>, vector<16x128xf32>
    %4 = arith.truncf %3 : vector<16x128xf32> to vector<16x128xbf16>
    %c0_2 = arith.constant 0 : index
    %c0_3 = arith.constant 0 : index
    %5 = vector.load %arg3[%c0_2, %c0_3] : memref<128x256xbf16, #tpu.memory_space<vmem>>, vector<128x256xbf16>
    %cst = arith.constant dense<0.000000e+00> : vector<16x256xf32>
    %6 = tpu.matmul %4, %5, %cst {dimension_numbers = #tpu.dot_dimension_numbers<[1], [0], [0], [1], [0, 0, 1, 1], [], []>} : vector<16x128xbf16>, vector<128x256xbf16>, vector<16x256xf32> -> vector<16x256xf32>
    %7 = vector.extract_strided_slice %6 {offsets = [0, 0], sizes = [16, 128], strides = [1, 1]} : vector<16x256xf32> to vector<16x128xf32>
    %8 = vector.extract_strided_slice %6 {offsets = [0, 128], sizes = [16, 128], strides = [1, 1]} : vector<16x256xf32> to vector<16x128xf32>
    %9 = arith.negf %7 : vector<16x128xf32>
    %10 = math.exp %9 : vector<16x128xf32>
    %cst_4 = arith.constant 1.000000e+00 : f32
    %11 = vector.broadcast %cst_4 : f32 to vector<16x128xf32>
    %12 = arith.addf %11, %10 : vector<16x128xf32>
    %13 = arith.divf %11, %12 : vector<16x128xf32>
    %14 = arith.mulf %7, %13 : vector<16x128xf32>
    %15 = arith.mulf %14, %8 : vector<16x128xf32>
    %c0_5 = arith.constant 0 : index
    %c0_6 = arith.constant 0 : index
    %16 = vector.load %arg6[%c0_5, %c0_6] : memref<16x128xf32, #tpu.memory_space<vmem>>, vector<16x128xf32>
    %17 = arith.truncf %15 : vector<16x128xf32> to vector<16x128xbf16>
    %c0_7 = arith.constant 0 : index
    %c0_8 = arith.constant 0 : index
    %18 = vector.load %arg4[%c0_7, %c0_8] : memref<128x128xbf16, #tpu.memory_space<vmem>>, vector<128x128xbf16>
    %cst_9 = arith.constant dense<0.000000e+00> : vector<16x128xf32>
    %19 = tpu.matmul %17, %18, %cst_9 {dimension_numbers = #tpu.dot_dimension_numbers<[1], [0], [0], [1], [0, 0, 1, 1], [], []>} : vector<16x128xbf16>, vector<128x128xbf16>, vector<16x128xf32> -> vector<16x128xf32>
    %20 = arith.addf %16, %19 : vector<16x128xf32>
    %c0_10 = arith.constant 0 : index
    %c0_11 = arith.constant 0 : index
    %21 = vector.load %arg6[%c0_10, %c0_11] : memref<16x128xf32, #tpu.memory_space<vmem>>, vector<16x128xf32>
    tpu.vector_store %arg6[%c0_10, %c0_11], %20 {strides = array<i32>} : memref<16x128xf32, #tpu.memory_space<vmem>>, vector<16x128xf32>,
    %c0_i32_12 = arith.constant 0 : i32
    %22 = arith.cmpi eq, %arg1, %c0_i32_12 : i32
    %23 = arith.extui %22 : i1 to i32
    %c0_i32_13 = arith.constant 0 : i32
    %24 = arith.cmpi ne, %23, %c0_i32_13 : i32
    scf.if %24 {
      %c0_14 = arith.constant 0 : index
      %c0_15 = arith.constant 0 : index
      %25 = vector.load %arg6[%c0_14, %c0_15] : memref<16x128xf32, #tpu.memory_space<vmem>>, vector<16x128xf32>
      %c0_16 = arith.constant 0 : index
      %c0_17 = arith.constant 0 : index
      %26 = vector.load %arg5[%c0_16, %c0_17] : memref<16x128xf32, #tpu.memory_space<vmem>>, vector<16x128xf32>
      tpu.vector_store %arg5[%c0_16, %c0_17], %25 {strides = array<i32>} : memref<16x128xf32, #tpu.memory_space<vmem>>, vector<16x128xf32>,
    } else {
    }
    return
  }
  func.func @transform_0(%arg0: i32, %arg1: i32) -> (i32, i32) {
    %c0_i32 = arith.constant 0 : i32
    %c0_i32_0 = arith.constant 0 : i32
    return %arg0, %c0_i32 : i32, i32
  }
  func.func @transform_1(%arg0: i32, %arg1: i32) -> (i32, i32) {
    %c0_i32 = arith.constant 0 : i32
    %c0_i32_0 = arith.constant 0 : i32
    return %c0_i32, %arg1 : i32, i32
  }
  func.func @transform_2(%arg0: i32, %arg1: i32) -> (i32, i32) {
    %c0_i32 = arith.constant 0 : i32
    %c0_i32_0 = arith.constant 0 : i32
    return %arg1, %c0_i32 : i32, i32
  }
  func.func @transform_3(%arg0: i32, %arg1: i32) -> (i32, i32) {
    %c0_i32 = arith.constant 0 : i32
    %c0_i32_0 = arith.constant 0 : i32
    return %arg0, %c0_i32 : i32, i32
  }
}

</mosaic_0001>

<llo_original>
// kernel: tpu_custom_call.1
$region0: #{tpu_custom_call.1}
  #allocation0 [shape = 'u32[]', space=smem, size = 0x4, offset = 0x4, fixed_abs, tag = 'smem constant byte address 0x4 - core index']
  #allocation1 [shape = 'u32[144,128]{1,0:T(1,128)}', space=vmem, size = 0x12000, scoped, tag = 'internal scratch']
  #allocation2 [shape = 'f32[16,128]{1,0:T(8,128)}', space=vmem, size = 0x2000, scoped, tag = 'scratch operand']
  %s0 = inlined_call_operand.hbm [shape: f32[16,128], index: 0, kind: input, shape index: {}]
  %s1 = inlined_call_operand.hbm [shape: bf16[128,256], index: 1, kind: input, shape index: {}]
  %s2 = inlined_call_operand.hbm [shape: bf16[128,128], index: 2, kind: input, shape index: {}]
  %s3 = inlined_call_operand.hbm [shape: f32[16,128], index: 3, kind: output, shape index: {}]
  %s4 = sld [smem:[#allocation0]]
  $region42: #{tpu_custom_call.1} parent=0
    _
  %s6 = ssub.s32 1, %s4
  %s7 = scalar_select 0, %s6, %s4
  $region1: #{tpu_custom_call.1} parent=0
    #allocation3 [shape = 'u8[8192]{0}', space=vmem, size = 0x2000, scoped, tag = 'input window, operand 0, single buffered']
    #allocation4 [shape = 's32[1]{0}', space=sflag, size = 0x4, scoped, tag = 'scoped memory for tpu_custom_call.1']
    #allocation5 [shape = 's32[1]{0}', space=sflag, size = 0x4, scoped, tag = 'scoped memory for tpu_custom_call.1']
    #allocation6 [shape = 'u8[65536]{0}', space=vmem, size = 0x10000, scoped, tag = 'input window, operand 1, single buffered']
    #allocation7 [shape = 's32[1]{0}', space=sflag, size = 0x4, scoped, tag = 'scoped memory for tpu_custom_call.1']
    #allocation8 [shape = 'u8[32768]{0}', space=vmem, size = 0x8000, scoped, tag = 'input window, operand 2, single buffered']
    #allocation9 [shape = 'u8[8192]{0}', space=vmem, size = 0x2000, scoped, tag = 'output window, operand 0, single buffered']
    %8 = vsyncpa [#allocation4], 0
    %9 = vsyncpa [#allocation7], 0
    %10 = vsyncpa [#allocation5], 0
    // Predicated region
    $region2: #{tpu_custom_call.1} parent=1 // pred_check
      _
    $region3: #{tpu_custom_call.1} parent=1 // pred_check_branch
      %12 = sbr.rel (0) target = $region5
    $region4: #{tpu_custom_call.1} parent=1 // pred_region
      %s14 = ssub.s32 256, 256
      %15 = vsyncadd [#allocation4], %s14
      %s16 = sshll.u32 [#allocation3], 4
      %s17 = int_to_ptr.vmem [resolvable:$true] %s16
      %22 = dma.hbm_to_vmem [thread:$0]  %s0, 256, %s17, [#allocation4], 128, 128, 8
    $region5: #{tpu_custom_call.1} parent=1 // pred_fallthru
      _
    // Predicated region
    $region6: #{tpu_custom_call.1} parent=1 // pred_check
      _
    $region7: #{tpu_custom_call.1} parent=1 // pred_check_branch
      %24 = sbr.rel (0) target = $region9
    $region8: #{tpu_custom_call.1} parent=1 // pred_region
      %s26 = ssub.s32 2048, 2048
      %27 = vsyncadd [#allocation7], %s26
      %s28 = sshll.u32 [#allocation6], 4
      %s29 = int_to_ptr.vmem [resolvable:$true] %s28
      %34 = dma.hbm_to_vmem [thread:$0]  %s1, 2048, %s29, [#allocation7], 128, 128, 8
    $region9: #{tpu_custom_call.1} parent=1 // pred_fallthru
      _
    // Predicated region
    $region10: #{tpu_custom_call.1} parent=1 // pred_check
      _
    $region11: #{tpu_custom_call.1} parent=1 // pred_check_branch
      %36 = sbr.rel (0) target = $region13
    $region12: #{tpu_custom_call.1} parent=1 // pred_region
      %s38 = ssub.s32 1024, 1024
      %39 = vsyncadd [#allocation7], %s38
      %s40 = sshll.u32 [#allocation8], 4
      %s41 = int_to_ptr.vmem [resolvable:$true] %s40
      %46 = dma.hbm_to_vmem [thread:$0]  %s2, 1024, %s41, [#allocation7], 64, 64, 4
    $region13: #{tpu_custom_call.1} parent=1 // pred_fallthru
      _
    // Predicated region
    $region14: #{tpu_custom_call.1} parent=1 // pred_check
      _
    $region15: #{tpu_custom_call.1} parent=1 // pred_check_branch
      %48 = sbr.rel (0) target = $region17
    $region16: #{tpu_custom_call.1} parent=1 // pred_region
      %49 = dma.done [#allocation4], 256
    $region17: #{tpu_custom_call.1} parent=1 // pred_fallthru
      _
    // Predicated region
    $region18: #{tpu_custom_call.1} parent=1 // pred_check
      _
    $region19: #{tpu_custom_call.1} parent=1 // pred_check_branch
      %51 = sbr.rel (0) target = $region21
    $region20: #{tpu_custom_call.1} parent=1 // pred_region
      %52 = dma.done [#allocation7], 2048
    $region21: #{tpu_custom_call.1} parent=1 // pred_fallthru
      _
    // Predicated region
    $region22: #{tpu_custom_call.1} parent=1 // pred_check
      _
    $region23: #{tpu_custom_call.1} parent=1 // pred_check_branch
      %54 = sbr.rel (0) target = $region25
    $region24: #{tpu_custom_call.1} parent=1 // pred_region
      %55 = dma.done [#allocation7], 1024
    $region25: #{tpu_custom_call.1} parent=1 // pred_fallthru
      _
    %p57 = scmp.eq.s32.totalorder 0, 0
    // Predicated region
    $region26: #{tpu_custom_call.1} parent=1 // pred_check
      %p58 = pneg %p57
    $region27: #{tpu_custom_call.1} parent=1 // pred_check_branch
      %60 = sbr.rel (%p58) target = $region29
    $region28: #{tpu_custom_call.1} parent=1 // pred_region
      %61 = vst [vmem:[#allocation2] sm:$0xff] 0.0
      %62 = vst [vmem:[#allocation2 + $0x8] sm:$0xff] 0.0
    $region29: #{tpu_custom_call.1} parent=1 // pred_fallthru
      _
    %v63 = vld [vmem:[#allocation3] sm:$0xff]
    %v64 = vld [vmem:[#allocation3 + $0x8] sm:$0xff]
    %v65 = vpack.c.bf16 %v64, %v63
    %v66 = vld [vmem:[#allocation6] sm:$0xff]
    %v67 = vld [vmem:[#allocation6 + $0x8] sm:$0xff]
    %v68 = vld [vmem:[#allocation6 + $0x10] sm:$0xff]
    %v69 = vld [vmem:[#allocation6 + $0x18] sm:$0xff]
    %v70 = vld [vmem:[#allocation6 + $0x20] sm:$0xff]
    %v71 = vld [vmem:[#allocation6 + $0x28] sm:$0xff]
    %v72 = vld [vmem:[#allocation6 + $0x30] sm:$0xff]
    %v73 = vld [vmem:[#allocation6 + $0x38] sm:$0xff]
    %v74 = vld [vmem:[#allocation6 + $0x40] sm:$0xff]
    %v75 = vld [vmem:[#allocation6 + $0x48] sm:$0xff]
    %v76 = vld [vmem:[#allocation6 + $0x50] sm:$0xff]
    %v77 = vld [vmem:[#allocation6 + $0x58] sm:$0xff]
    %v78 = vld [vmem:[#allocation6 + $0x60] sm:$0xff]
    %v79 = vld [vmem:[#allocation6 + $0x68] sm:$0xff]
    %v80 = vld [vmem:[#allocation6 + $0x70] sm:$0xff]
    %v81 = vld [vmem:[#allocation6 + $0x78] sm:$0xff]
    %v98 = vunpack.c.l.b16 %v66
    %v99 = vunpack.c.h.b16 %v66
    %v100 = vunpack.c.l.b16 %v67
    %v101 = vunpack.c.h.b16 %v67
    %v102 = vunpack.c.l.b16 %v68
    %v103 = vunpack.c.h.b16 %v68
    %v104 = vunpack.c.l.b16 %v69
    %v105 = vunpack.c.h.b16 %v69
    %v106 = vunpack.c.l.b16 %v70
    %v107 = vunpack.c.h.b16 %v70
    %v108 = vunpack.c.l.b16 %v71
    %v109 = vunpack.c.h.b16 %v71
    %v110 = vunpack.c.l.b16 %v72
    %v111 = vunpack.c.h.b16 %v72
    %v112 = vunpack.c.l.b16 %v73
    %v113 = vunpack.c.h.b16 %v73
    %v114 = vunpack.c.l.b16 %v74
    %v115 = vunpack.c.h.b16 %v74
    %v116 = vunpack.c.l.b16 %v75
    %v117 = vunpack.c.h.b16 %v75
    %v118 = vunpack.c.l.b16 %v76
    %v119 = vunpack.c.h.b16 %v76
    %v120 = vunpack.c.l.b16 %v77
    %v121 = vunpack.c.h.b16 %v77
    %v122 = vunpack.c.l.b16 %v78
    %v123 = vunpack.c.h.b16 %v78
    %v124 = vunpack.c.l.b16 %v79
    %v125 = vunpack.c.h.b16 %v79
    %v126 = vunpack.c.l.b16 %v80
    %v127 = vunpack.c.h.b16 %v80
    %v128 = vunpack.c.l.b16 %v81
    %v129 = vunpack.c.h.b16 %v81
    %v130 = vpack.c.b16 %v100, %v98
    %v131 = vpack.c.b16 %v101, %v99
    %v132 = vpack.c.b16 %v104, %v102
    %v133 = vpack.c.b16 %v105, %v103
    %v134 = vpack.c.b16 %v108, %v106
    %v135 = vpack.c.b16 %v109, %v107
    %v136 = vpack.c.b16 %v112, %v110
    %v137 = vpack.c.b16 %v113, %v111
    %v138 = vpack.c.b16 %v116, %v114
    %v139 = vpack.c.b16 %v117, %v115
    %v140 = vpack.c.b16 %v120, %v118
    %v141 = vpack.c.b16 %v121, %v119
    %v142 = vpack.c.b16 %v124, %v122
    %v143 = vpack.c.b16 %v125, %v123
    %v144 = vpack.c.b16 %v128, %v126
    %v145 = vpack.c.b16 %v129, %v127
    %162 = vmatprep.subr.bf16.mxu0 %v145
    %163 = vmatpush1.bf16.msra.mxu0 %v144
    %164 = vmatprep.subr.bf16.mxu0 %v143
    %165 = vmatpush1.bf16.msra.mxu0 %v142
    %166 = vmatprep.subr.bf16.mxu0 %v141
    %167 = vmatpush1.bf16.msra.mxu0 %v140
    %168 = vmatprep.subr.bf16.mxu0 %v139
    %169 = vmatpush1.bf16.msra.mxu0 %v138
    %170 = vmatprep.subr.bf16.mxu0 %v137
    %171 = vmatpush1.bf16.msra.mxu0 %v136
    %172 = vmatprep.subr.bf16.mxu0 %v135
    %173 = vmatpush1.bf16.msra.mxu0 %v134
    %174 = vmatprep.subr.bf16.mxu0 %v133
    %175 = vmatpush1.bf16.msra.mxu0 %v132
    %176 = vmatprep.subr.bf16.mxu0 %v131
    %177 = vmatpush1.bf16.msra.mxu0 %v130
    %178 = vmatprep.subr.bf16.mxu0 0
    %179 = vmatpush2.bf16.msra.mxu0 0
    %180 = vmatprep.subr.bf16.mxu0 0
    %181 = vmatpush2.bf16.msra.mxu0 0
    %182 = vmatprep.subr.bf16.mxu0 0
    %183 = vmatpush2.bf16.msra.mxu0 0
    %184 = vmatprep.subr.bf16.mxu0 0
    %185 = vmatpush2.bf16.msra.mxu0 0
    %186 = vmatprep.subr.bf16.mxu0 0
    %187 = vmatpush2.bf16.msra.mxu0 0
    %188 = vmatprep.subr.bf16.mxu0 0
    %189 = vmatpush2.bf16.msra.mxu0 0
    %190 = vmatprep.subr.bf16.mxu0 0
    %191 = vmatpush2.bf16.msra.mxu0 0
    %192 = vmatprep.subr.bf16.mxu0 0
    %193 = vmatpush2.bf16.msra.mxu0 0
    %194 = vmatprep.mubr.bf16.mxu0 0
    %195 = vmatmul.mubr.bf16.gmra.mxu0 %v65
    %v196 = vpop.f32.mrf.mxu0
    %v197 = vadd.f32 0.0, %v196
    %v198 = vpop.f32.mrf.mxu0
    %v199 = vadd.f32 0.0, %v198
    %v200 = vpop.f32.mrf.mxu0
    %v201 = vadd.f32 0.0, %v200
    %v202 = vpop.f32.mrf.mxu0
    %v203 = vadd.f32 0.0, %v202
    %204 = vdwg.mxu0
    %v205 = vxor.u32 %v197, 2147483648
    %v206 = vxor.u32 %v201, 2147483648
    %v207 = vmul.f32 %v205, 1.442695
    %v208 = vpow.pop %v207
    %v209 = vmul.f32 %v206, 1.442695
    %v210 = vpow.pop %v209
    %v211 = vadd.f32 %v208, 1.0
    %v212 = vadd.f32 %v210, 1.0
    %v213 = vrcp.pop %v211
    %v214 = vmul.f32 1.0, %v213
    %v215 = vrcp.pop %v212
    %v216 = vmul.f32 1.0, %v215
    %v217 = vmul.f32 %v197, %v214
    %v218 = vmul.f32 %v201, %v216
    %v219 = vmul.f32 %v217, %v199
    %v220 = vmul.f32 %v218, %v203
    %v221 = vld [vmem:[#allocation2] sm:$0xff]
    %v222 = vld [vmem:[#allocation2 + $0x8] sm:$0xff]
    %v223 = vpack.c.bf16 %v220, %v219
    %v224 = vld [vmem:[#allocation8] sm:$0xf]
    %v225 = vld [vmem:[#allocation8 + $0x4] sm:$0xf]
    %v226 = vld [vmem:[#allocation8 + $0x8] sm:$0xf]
    %v227 = vld [vmem:[#allocation8 + $0xc] sm:$0xf]
    %v228 = vld [vmem:[#allocation8 + $0x10] sm:$0xf]
    %v229 = vld [vmem:[#allocation8 + $0x14] sm:$0xf]
    %v230 = vld [vmem:[#allocation8 + $0x18] sm:$0xf]
    %v231 = vld [vmem:[#allocation8 + $0x1c] sm:$0xf]
    %v232 = vld [vmem:[#allocation8 + $0x20] sm:$0xf]
    %v233 = vld [vmem:[#allocation8 + $0x24] sm:$0xf]
    %v234 = vld [vmem:[#allocation8 + $0x28] sm:$0xf]
    %v235 = vld [vmem:[#allocation8 + $0x2c] sm:$0xf]
    %v236 = vld [vmem:[#allocation8 + $0x30] sm:$0xf]
    %v237 = vld [vmem:[#allocation8 + $0x34] sm:$0xf]
    %v238 = vld [vmem:[#allocation8 + $0x38] sm:$0xf]
    %v239 = vld [vmem:[#allocation8 + $0x3c] sm:$0xf]
    %v256 = vunpack.c.l.b16 %v224
    %v257 = vunpack.c.l.b16 %v225
    %v258 = vunpack.c.l.b16 %v226
    %v259 = vunpack.c.l.b16 %v227
    %v260 = vunpack.c.l.b16 %v228
    %v261 = vunpack.c.l.b16 %v229
    %v262 = vunpack.c.l.b16 %v230
    %v263 = vunpack.c.l.b16 %v231
    %v264 = vunpack.c.l.b16 %v232
    %v265 = vunpack.c.l.b16 %v233
    %v266 = vunpack.c.l.b16 %v234
    %v267 = vunpack.c.l.b16 %v235
    %v268 = vunpack.c.l.b16 %v236
    %v269 = vunpack.c.l.b16 %v237
    %v270 = vunpack.c.l.b16 %v238
    %v271 = vunpack.c.l.b16 %v239
    %v272 = vpack.c.b16 %v257, %v256
    %v273 = vpack.c.b16 %v259, %v258
    %v274 = vpack.c.b16 %v261, %v260
    %v275 = vpack.c.b16 %v263, %v262
    %v276 = vpack.c.b16 %v265, %v264
    %v277 = vpack.c.b16 %v267, %v266
    %v278 = vpack.c.b16 %v269, %v268
    %v279 = vpack.c.b16 %v271, %v270
    %288 = vmatprep.subr.bf16.mxu0 0
    %289 = vmatpush1.bf16.msra.mxu0 %v279
    %290 = vmatprep.subr.bf16.mxu0 0
    %291 = vmatpush1.bf16.msra.mxu0 %v278
    %292 = vmatprep.subr.bf16.mxu0 0
    %293 = vmatpush1.bf16.msra.mxu0 %v277
    %294 = vmatprep.subr.bf16.mxu0 0
    %295 = vmatpush1.bf16.msra.mxu0 %v276
    %296 = vmatprep.subr.bf16.mxu0 0
    %297 = vmatpush1.bf16.msra.mxu0 %v275
    %298 = vmatprep.subr.bf16.mxu0 0
    %299 = vmatpush1.bf16.msra.mxu0 %v274
    %300 = vmatprep.subr.bf16.mxu0 0
    %301 = vmatpush1.bf16.msra.mxu0 %v273
    %302 = vmatprep.subr.bf16.mxu0 0
    %303 = vmatpush1.bf16.msra.mxu0 %v272
    %304 = vmatprep.subr.bf16.mxu0 0
    %305 = vmatpush2.bf16.msra.mxu0 0
    %306 = vmatprep.subr.bf16.mxu0 0
    %307 = vmatpush2.bf16.msra.mxu0 0
    %308 = vmatprep.subr.bf16.mxu0 0
    %309 = vmatpush2.bf16.msra.mxu0 0
    %310 = vmatprep.subr.bf16.mxu0 0
    %311 = vmatpush2.bf16.msra.mxu0 0
    %312 = vmatprep.subr.bf16.mxu0 0
    %313 = vmatpush2.bf16.msra.mxu0 0
    %314 = vmatprep.subr.bf16.mxu0 0
    %315 = vmatpush2.bf16.msra.mxu0 0
    %316 = vmatprep.subr.bf16.mxu0 0
    %317 = vmatpush2.bf16.msra.mxu0 0
    %318 = vmatprep.subr.bf16.mxu0 0
    %319 = vmatpush2.bf16.msra.mxu0 0
    %320 = vmatprep.mubr.bf16.mxu0 0
    %321 = vmatmul.mubr.bf16.gmra.mxu0 %v223
    %v322 = vpop.f32.mrf.mxu0
    %v323 = vadd.f32 0.0, %v322
    %v324 = vpop.f32.mrf.mxu0
    %v325 = vpop.f32.mrf.mxu0
    %v326 = vadd.f32 0.0, %v325
    %v327 = vpop.f32.mrf.mxu0
    %328 = vdwg.mxu0
    %v329 = vadd.f32 %v221, %v323
    %v330 = vadd.f32 %v222, %v326
    %331 = vst [vmem:[#allocation2] sm:$0xff] %v329
    %332 = vst [vmem:[#allocation2 + $0x8] sm:$0xff] %v330
    // Predicated region
    $region30: #{tpu_custom_call.1} parent=1 // pred_check
      %p333 = pneg %p57
    $region31: #{tpu_custom_call.1} parent=1 // pred_check_branch
      %335 = sbr.rel (%p333) target = $region33
    $region32: #{tpu_custom_call.1} parent=1 // pred_region
      %v336 = vld [vmem:[#allocation2] sm:$0xff]
      %v337 = vld [vmem:[#allocation2 + $0x8] sm:$0xff]
      %338 = vst [vmem:[#allocation9] sm:$0xff] %v336
      %339 = vst [vmem:[#allocation9 + $0x8] sm:$0xff] %v337
    $region33: #{tpu_custom_call.1} parent=1 // pred_fallthru
      _
    // Predicated region
    $region34: #{tpu_custom_call.1} parent=1 // pred_check
      _
    $region35: #{tpu_custom_call.1} parent=1 // pred_check_branch
      %341 = sbr.rel (0) target = $region37
    $region36: #{tpu_custom_call.1} parent=1 // pred_region
      %s343 = ssub.s32 256, 256
      %344 = vsyncadd [#allocation5], %s343
      %s345 = sshll.u32 [#allocation9], 4
      %s346 = int_to_ptr.vmem [resolvable:$true] %s345
      %351 = dma.vmem_to_hbm [thread:$0]  %s346, 256, %s3, [#allocation5], 128, 128, 8
    $region37: #{tpu_custom_call.1} parent=1 // pred_fallthru
      _
    // Predicated region
    $region38: #{tpu_custom_call.1} parent=1 // pred_check
      _
    $region39: #{tpu_custom_call.1} parent=1 // pred_check_branch
      %353 = sbr.rel (0) target = $region41
    $region40: #{tpu_custom_call.1} parent=1 // pred_region
      %354 = dma.done [#allocation5], 256
    $region41: #{tpu_custom_call.1} parent=1 // pred_fallthru
      _
    %355 = vsyncpa [#allocation4], 1
    %356 = vsyncpa [#allocation7], 1
    %357 = vsyncpa [#allocation5], 1

</llo_original>
